<compile_context>
chip_gen: v7x
topology: tpu7x:2x2x1
jax: 0.10.0
libtpu: 0.0.40
codegen_flags: <defaults>
</compile_context>

<pallas_src>
import functools

import jax
import jax.numpy as jnp
from jax.experimental import pallas as pl
from jax.experimental.pallas import tpu as pltpu


LEAKY_SLOPE = 0.2  # Label_Decoder default: nn.LeakyReLU(negative_slope=0.2)


def _round_up(x, m):
    return ((x + m - 1) // m) * m


# --------------------------------------------------------------------------
# Kernel
# --------------------------------------------------------------------------
def label_decoder_kernel(u_ref, w1_ref, b1_ref, w2_ref, b2_ref, w3_ref, b3_ref,
                         out_ref, *, slope):
    # u_ref  : (TB, dim_z)      streamed batch tile (real feature width)
    # w1_ref : (dim_z, P_h)     resident (zero-padded cols)
    # w2_ref : (P_h, P_h)       resident
    # w3_ref : (P_h, P_u)       resident
    # b*_ref : (1, P_*)         resident, always f32
    # Layer 1: Linear + LeakyReLU  (MXU in compute dtype, f32 accumulate)
    h = jnp.dot(u_ref[...], w1_ref[...], preferred_element_type=jnp.float32)
    h = h + b1_ref[...]
    h = jnp.maximum(h, slope * h)
    # Layer 2: Linear + LeakyReLU
    h = jnp.dot(h.astype(w2_ref.dtype), w2_ref[...],
                preferred_element_type=jnp.float32)
    h = h + b2_ref[...]
    h = jnp.maximum(h, slope * h)
    # Output layer: Linear (no activation)
    o = jnp.dot(h.astype(w3_ref.dtype), w3_ref[...],
                preferred_element_type=jnp.float32)
    o = o + b3_ref[...]
    out_ref[...] = o.astype(out_ref.dtype)


# --------------------------------------------------------------------------
# Host-side parameter packing (per-layer padding, not a common P)
# --------------------------------------------------------------------------
def pack_params(params, dim_z, hidden_nodes, dim_u, compute_dtype=jnp.float32):
    """Zero-pad each layer independently. Weights carry the MXU compute dtype
    (f32 or bf16); biases stay f32 (bias add + activation are done in f32)."""
    P_h = _round_up(hidden_nodes, 128)
    P_u = _round_up(dim_u, 128)
    w1 = jnp.zeros((dim_z, P_h), compute_dtype).at[:, :hidden_nodes].set(
        params["w1"].astype(compute_dtype))
    w2 = jnp.zeros((P_h, P_h), compute_dtype).at[:hidden_nodes, :hidden_nodes].set(
        params["w2"].astype(compute_dtype))
    w3 = jnp.zeros((P_h, P_u), compute_dtype).at[:hidden_nodes, :dim_u].set(
        params["w3"].astype(compute_dtype))
    b1 = jnp.zeros((1, P_h), jnp.float32).at[:, :hidden_nodes].set(
        params["b1"].astype(jnp.float32))
    b2 = jnp.zeros((1, P_h), jnp.float32).at[:, :hidden_nodes].set(
        params["b2"].astype(jnp.float32))
    b3 = jnp.zeros((1, P_u), jnp.float32).at[:, :dim_u].set(
        params["b3"].astype(jnp.float32))
    return (w1, b1, w2, b2, w3, b3)


def _choose_batch_tile(B, max_block_b):
    """Pick a batch tile that (a) amortizes per-step pipeline overhead and
    (b) gives >=2 grid steps when possible so both v7x TensorCores get work."""
    max_block_b = max(8, _round_up(max_block_b, 8))
    B8 = _round_up(B, 8)
    if B8 > max_block_b:
        TB = max_block_b
    elif B8 >= 16:
        TB = _round_up(B8 // 2, 8)   # ~2 grid steps
    else:
        TB = B8                      # tiny batch: single step
    B_pad = _round_up(B, TB)
    return TB, B_pad


# --------------------------------------------------------------------------
# Forward wrapper
# --------------------------------------------------------------------------
def label_decoder_forward(u, packed, dim_u, *, leaky_slope=LEAKY_SLOPE,
                          max_block_b=1024, out_dtype=jnp.float32):
    """Fused MLP forward.  u: (B, dim_z).  Returns (B, dim_u) in out_dtype."""
    w1, b1, w2, b2, w3, b3 = packed
    B, dim_z = u.shape
    P_h = w1.shape[1]
    P_u = w3.shape[1]
    compute_dtype = w1.dtype

    TB, B_pad = _choose_batch_tile(B, max_block_b)
    n_blocks = B_pad // TB

    # Stream activations in the MXU compute dtype; pad batch rows only if needed.
    u_in = u.astype(compute_dtype)
    if B_pad != B:
        u_in = jnp.pad(u_in, ((0, B_pad - B), (0, 0)))

    kernel = functools.partial(label_decoder_kernel, slope=leaky_slope)
    resident = pl.BlockSpec(memory_space=pltpu.MemorySpace.VMEM)  # single-buffered

    in_itemsize = jnp.dtype(compute_dtype).itemsize
    out_itemsize = jnp.dtype(out_dtype).itemsize
    weight_bytes = sum(int(a.size) * a.dtype.itemsize
                       for a in (w1, b1, w2, b2, w3, b3))
    flops = 2 * B_pad * (dim_z * P_h + P_h * P_h + P_h * P_u)
    bytes_accessed = B_pad * (dim_z * in_itemsize + P_u * out_itemsize) + weight_bytes
    # VMEM: resident weights (single copy) + double-buffered activation tiles.
    act_bytes = 2 * TB * (dim_z * in_itemsize + P_u * out_itemsize)
    vmem_limit = int(min(100 << 20, max(32 << 20, 2 * (weight_bytes + act_bytes))))

    out_p = pl.pallas_call(
        kernel,
        out_shape=jax.ShapeDtypeStruct((B_pad, P_u), out_dtype),
        grid=(n_blocks,),
        in_specs=[
            pl.BlockSpec((TB, dim_z), lambda i: (i, 0)),   # activations: streamed
            resident, resident,                            # w1, b1
            resident, resident,                            # w2, b2
            resident, resident,                            # w3, b3
        ],
        out_specs=pl.BlockSpec((TB, P_u), lambda i: (i, 0)),  # lane-dense output
        compiler_params=pltpu.CompilerParams(
            dimension_semantics=("parallel",),  # shard batch tiles across TCs
            vmem_limit_bytes=vmem_limit,
        ),
        cost_estimate=pl.CostEstimate(
            flops=int(flops), transcendentals=0,
            bytes_accessed=int(bytes_accessed)),
    )(u_in, w1, b1, w2, b2, w3, b3)

    # Slice the padded output back to the real shape.
    return out_p[:B, :dim_u]


# --------------------------------------------------------------------------
# Parameters (PyTorch nn.Linear-like uniform init), stored as (in, out)
# --------------------------------------------------------------------------
def init_params(key, dim_u, dim_z, hidden_nodes, dtype=jnp.float32):
    ks = jax.random.split(key, 6)

    def lin(k_w, k_b, fan_in, fan_out):
        bound = 1.0 / jnp.sqrt(jnp.array(fan_in, dtype=jnp.float32))
        w = jax.random.uniform(k_w, (fan_in, fan_out), dtype, -bound, bound)
        b = jax.random.uniform(k_b, (1, fan_out), dtype, -bound, bound)
        return w, b

    w1, b1 = lin(ks[0], ks[1], dim_z, hidden_nodes)
    w2, b2 = lin(ks[2], ks[3], hidden_nodes, hidden_nodes)
    w3, b3 = lin(ks[4], ks[5], hidden_nodes, dim_u)
    return {"w1": w1, "b1": b1, "w2": w2, "b2": b2, "w3": w3, "b3": b3}


def reference_forward(u, params, slope=LEAKY_SLOPE):
    """Pure-JAX reference for correctness check."""
    h = u @ params["w1"] + params["b1"]
    h = jnp.where(h >= 0, h, slope * h)
    h = h @ params["w2"] + params["b2"]
    h = jnp.where(h >= 0, h, slope * h)
    return h @ params["w3"] + params["b3"]


if __name__ == "__main__":
    # Small shapes consistent with Label_Decoder(dim_u, dim_z, hidden_nodes)
    batch, dim_u, dim_z, hidden_nodes = 8, 16, 32, 64

    key = jax.random.PRNGKey(0)
    k_params, k_input = jax.random.split(key)

    params = init_params(k_params, dim_u, dim_z, hidden_nodes)
    u = jax.random.normal(k_input, (batch, dim_z), dtype=jnp.float32)
    ref = reference_forward(u, params)

    # f32 path -- exact zero-padding semantics, strict check.
    packed_f32 = pack_params(params, dim_z, hidden_nodes, dim_u, jnp.float32)
    out = jax.block_until_ready(label_decoder_forward(u, packed_f32, dim_u))
    assert out.shape == (batch, dim_u), out.shape
    assert jnp.allclose(out, ref, atol=1e-4, rtol=1e-4), "f32 mismatch vs reference"

    # bf16-streaming path (v6e/v7x bandwidth optimization) -- loose check.
    packed_bf16 = pack_params(params, dim_z, hidden_nodes, dim_u, jnp.bfloat16)
    out_bf16 = jax.block_until_ready(label_decoder_forward(u, packed_bf16, dim_u))
    assert out_bf16.shape == (batch, dim_u), out_bf16.shape
    assert jnp.allclose(out_bf16, ref, atol=1e-1, rtol=1e-1), "bf16 mismatch vs reference"

    print("KERNEL_OK")
</pallas_src>

<mosaic_0001>
module attributes {stable_mosaic.version = 11 : i64} {
  func.func @label_decoder_kernel(%arg0: i32, %arg1: memref<8x32xf32, #tpu.memory_space<vmem>>, %arg2: memref<32x128xf32, #tpu.memory_space<vmem>>, %arg3: memref<1x128xf32, #tpu.memory_space<vmem>>, %arg4: memref<128x128xf32, #tpu.memory_space<vmem>>, %arg5: memref<1x128xf32, #tpu.memory_space<vmem>>, %arg6: memref<128x128xf32, #tpu.memory_space<vmem>>, %arg7: memref<1x128xf32, #tpu.memory_space<vmem>>, %arg8: memref<8x128xf32, #tpu.memory_space<vmem>>) attributes {dimension_semantics = [#tpu.dimension_semantics<parallel>], iteration_bounds = array<i64: 1>, scalar_prefetch = 0 : i64, scratch_operands = 0 : i64, tpu.core_type = #tpu.core_type<tc>, window_params = [{transform_indices = @transform_0, window_bounds = array<i64: 8, 32>}, {pipeline_mode = #tpu.pipeline_mode<synchronous>, transform_indices = @transform_1, window_bounds = array<i64: 32, 128>}, {pipeline_mode = #tpu.pipeline_mode<synchronous>, transform_indices = @transform_2, window_bounds = array<i64: 1, 128>}, {pipeline_mode = #tpu.pipeline_mode<synchronous>, transform_indices = @transform_3, window_bounds = array<i64: 128, 128>}, {pipeline_mode = #tpu.pipeline_mode<synchronous>, transform_indices = @transform_4, window_bounds = array<i64: 1, 128>}, {pipeline_mode = #tpu.pipeline_mode<synchronous>, transform_indices = @transform_5, window_bounds = array<i64: 128, 128>}, {pipeline_mode = #tpu.pipeline_mode<synchronous>, transform_indices = @transform_6, window_bounds = array<i64: 1, 128>}, {transform_indices = @transform_7, window_bounds = array<i64: 8, 128>}]} {
    %c0 = arith.constant 0 : index
    %c0_0 = arith.constant 0 : index
    %0 = vector.load %arg1[%c0, %c0_0] : memref<8x32xf32, #tpu.memory_space<vmem>>, vector<8x32xf32>
    %c0_1 = arith.constant 0 : index
    %c0_2 = arith.constant 0 : index
    %1 = vector.load %arg2[%c0_1, %c0_2] : memref<32x128xf32, #tpu.memory_space<vmem>>, vector<32x128xf32>
    %cst = arith.constant dense<0.000000e+00> : vector<8x128xf32>
    %2 = tpu.matmul %0, %1, %cst {dimension_numbers = #tpu.dot_dimension_numbers<[1], [0], [0], [1], [0, 0, 1, 1], [], []>} : vector<8x32xf32>, vector<32x128xf32>, vector<8x128xf32> -> vector<8x128xf32>
    %c0_3 = arith.constant 0 : index
    %c0_4 = arith.constant 0 : index
    %3 = vector.load %arg3[%c0_3, %c0_4] : memref<1x128xf32, #tpu.memory_space<vmem>>, vector<1x128xf32>
    %4 = vector.broadcast %3 : vector<1x128xf32> to vector<8x128xf32>
    %5 = arith.addf %2, %4 : vector<8x128xf32>
    %cst_5 = arith.constant 2.000000e-01 : f32
    %6 = vector.broadcast %cst_5 : f32 to vector<8x128xf32>
    %7 = arith.mulf %6, %5 : vector<8x128xf32>
    %8 = arith.maximumf %5, %7 : vector<8x128xf32>
    %c0_6 = arith.constant 0 : index
    %c0_7 = arith.constant 0 : index
    %9 = vector.load %arg4[%c0_6, %c0_7] : memref<128x128xf32, #tpu.memory_space<vmem>>, vector<128x128xf32>
    %cst_8 = arith.constant dense<0.000000e+00> : vector<8x128xf32>
    %10 = tpu.matmul %8, %9, %cst_8 {dimension_numbers = #tpu.dot_dimension_numbers<[1], [0], [0], [1], [0, 0, 1, 1], [], []>} : vector<8x128xf32>, vector<128x128xf32>, vector<8x128xf32> -> vector<8x128xf32>
    %c0_9 = arith.constant 0 : index
    %c0_10 = arith.constant 0 : index
    %11 = vector.load %arg5[%c0_9, %c0_10] : memref<1x128xf32, #tpu.memory_space<vmem>>, vector<1x128xf32>
    %12 = vector.broadcast %11 : vector<1x128xf32> to vector<8x128xf32>
    %13 = arith.addf %10, %12 : vector<8x128xf32>
    %cst_11 = arith.constant 2.000000e-01 : f32
    %14 = vector.broadcast %cst_11 : f32 to vector<8x128xf32>
    %15 = arith.mulf %14, %13 : vector<8x128xf32>
    %16 = arith.maximumf %13, %15 : vector<8x128xf32>
    %c0_12 = arith.constant 0 : index
    %c0_13 = arith.constant 0 : index
    %17 = vector.load %arg6[%c0_12, %c0_13] : memref<128x128xf32, #tpu.memory_space<vmem>>, vector<128x128xf32>
    %cst_14 = arith.constant dense<0.000000e+00> : vector<8x128xf32>
    %18 = tpu.matmul %16, %17, %cst_14 {dimension_numbers = #tpu.dot_dimension_numbers<[1], [0], [0], [1], [0, 0, 1, 1], [], []>} : vector<8x128xf32>, vector<128x128xf32>, vector<8x128xf32> -> vector<8x128xf32>
    %c0_15 = arith.constant 0 : index
    %c0_16 = arith.constant 0 : index
    %19 = vector.load %arg7[%c0_15, %c0_16] : memref<1x128xf32, #tpu.memory_space<vmem>>, vector<1x128xf32>
    %20 = vector.broadcast %19 : vector<1x128xf32> to vector<8x128xf32>
    %21 = arith.addf %18, %20 : vector<8x128xf32>
    %c0_17 = arith.constant 0 : index
    %c0_18 = arith.constant 0 : index
    %22 = vector.load %arg8[%c0_17, %c0_18] : memref<8x128xf32, #tpu.memory_space<vmem>>, vector<8x128xf32>
    tpu.vector_store %arg8[%c0_17, %c0_18], %21 {strides = array<i32>} : memref<8x128xf32, #tpu.memory_space<vmem>>, vector<8x128xf32>,
    return
  }
  func.func @transform_0(%arg0: i32) -> (i32, i32) {
    %c0_i32 = arith.constant 0 : i32
    %c0_i32_0 = arith.constant 0 : i32
    return %arg0, %c0_i32 : i32, i32
  }
  func.func @transform_1(%arg0: i32) -> (i32, i32) {
    %c0_i32 = arith.constant 0 : i32
    %c0_i32_0 = arith.constant 0 : i32
    %c0_i32_1 = arith.constant 0 : i32
    return %c0_i32, %c0_i32_0 : i32, i32
  }
  func.func @transform_2(%arg0: i32) -> (i32, i32) {
    %c0_i32 = arith.constant 0 : i32
    %c0_i32_0 = arith.constant 0 : i32
    %c0_i32_1 = arith.constant 0 : i32
    return %c0_i32, %c0_i32_0 : i32, i32
  }
  func.func @transform_3(%arg0: i32) -> (i32, i32) {
    %c0_i32 = arith.constant 0 : i32
    %c0_i32_0 = arith.constant 0 : i32
    %c0_i32_1 = arith.constant 0 : i32
    return %c0_i32, %c0_i32_0 : i32, i32
  }
  func.func @transform_4(%arg0: i32) -> (i32, i32) {
    %c0_i32 = arith.constant 0 : i32
    %c0_i32_0 = arith.constant 0 : i32
    %c0_i32_1 = arith.constant 0 : i32
    return %c0_i32, %c0_i32_0 : i32, i32
  }
  func.func @transform_5(%arg0: i32) -> (i32, i32) {
    %c0_i32 = arith.constant 0 : i32
    %c0_i32_0 = arith.constant 0 : i32
    %c0_i32_1 = arith.constant 0 : i32
    return %c0_i32, %c0_i32_0 : i32, i32
  }
  func.func @transform_6(%arg0: i32) -> (i32, i32) {
    %c0_i32 = arith.constant 0 : i32
    %c0_i32_0 = arith.constant 0 : i32
    %c0_i32_1 = arith.constant 0 : i32
    return %c0_i32, %c0_i32_0 : i32, i32
  }
  func.func @transform_7(%arg0: i32) -> (i32, i32) {
    %c0_i32 = arith.constant 0 : i32
    %c0_i32_0 = arith.constant 0 : i32
    return %arg0, %c0_i32 : i32, i32
  }
}

</mosaic_0001>

<llo_original>
// kernel: tpu_custom_call.1
$region0: #{tpu_custom_call.1}
  #allocation0 [shape = 'u32[]', space=smem, size = 0x4, offset = 0x4, fixed_abs, tag = 'smem constant byte address 0x4 - core index']
  #allocation1 [shape = 'u32[144,128]{1,0:T(1,128)}', space=vmem, size = 0x12000, scoped, tag = 'internal scratch']
  %s0 = inlined_call_operand.hbm [shape: f32[8,32], index: 0, kind: input, shape index: {}]
  %s1 = inlined_call_operand.hbm [shape: f32[32,128], index: 1, kind: input, shape index: {}]
  %s2 = inlined_call_operand.vmem [shape: f32[1,128], index: 2, kind: input, shape index: {}]
  %s3 = inlined_call_operand.hbm [shape: f32[128,128], index: 3, kind: input, shape index: {}]
  %s4 = inlined_call_operand.vmem [shape: f32[1,128], index: 4, kind: input, shape index: {}]
  %s5 = inlined_call_operand.hbm [shape: f32[128,128], index: 5, kind: input, shape index: {}]
  %s6 = inlined_call_operand.vmem [shape: f32[1,128], index: 6, kind: input, shape index: {}]
  %s7 = inlined_call_operand.hbm [shape: f32[8,128], index: 7, kind: output, shape index: {}]
  %s8 = sld [smem:[#allocation0]]
  $region54: #{tpu_custom_call.1} parent=0
    _
  %s10 = ssub.s32 1, %s8
  %s11 = scalar_select 0, %s10, %s8
  $region1: #{tpu_custom_call.1} parent=0
    #allocation2 [shape = 'u8[4096]{0}', space=vmem, size = 0x1000, scoped, tag = 'input window, operand 0, single buffered']
    #allocation3 [shape = 's32[1]{0}', space=sflag, size = 0x4, scoped, tag = 'scoped memory for tpu_custom_call.1']
    #allocation4 [shape = 's32[1]{0}', space=sflag, size = 0x4, scoped, tag = 'scoped memory for tpu_custom_call.1']
    #allocation5 [shape = 'u8[16384]{0}', space=vmem, size = 0x4000, scoped, tag = 'input window, operand 1, single buffered']
    #allocation6 [shape = 's32[1]{0}', space=sflag, size = 0x4, scoped, tag = 'scoped memory for tpu_custom_call.1']
    #allocation7 [shape = 'u8[65536]{0}', space=vmem, size = 0x10000, scoped, tag = 'input window, operand 3, single buffered']
    #allocation8 [shape = 'u8[65536]{0}', space=vmem, size = 0x10000, scoped, tag = 'input window, operand 5, single buffered']
    #allocation9 [shape = 's32[1]{0}', space=sflag, size = 0x4, scoped, tag = 'scoped memory for tpu_custom_call.1']
    #allocation10 [shape = 'u8[4096]{0}', space=vmem, size = 0x1000, scoped, tag = 'output window, operand 0, single buffered']
    %12 = vsyncpa [#allocation3], 0
    %13 = vsyncpa [#allocation6], 0
    %14 = vsyncpa [#allocation9], 0
    %15 = vsyncpa [#allocation4], 0
    // Predicated region
    $region2: #{tpu_custom_call.1} parent=1 // pred_check
      _
    $region3: #{tpu_custom_call.1} parent=1 // pred_check_branch
      %17 = sbr.rel (0) target = $region5
    $region4: #{tpu_custom_call.1} parent=1 // pred_region
      %s19 = ssub.s32 128, 128
      %20 = vsyncadd [#allocation3], %s19
      %s22 = sshll.u32 [#allocation2], 4
      %s23 = int_to_ptr.vmem [resolvable:$true] %s22
      %25 = dma.hbm_to_vmem [thread:$0]  %s0, 128, %s23, [#allocation3]
    $region5: #{tpu_custom_call.1} parent=1 // pred_fallthru
      _
    // Predicated region
    $region6: #{tpu_custom_call.1} parent=1 // pred_check
      _
    $region7: #{tpu_custom_call.1} parent=1 // pred_check_branch
      %27 = sbr.rel (0) target = $region9
    $region8: #{tpu_custom_call.1} parent=1 // pred_region
      %s29 = ssub.s32 512, 512
      %30 = vsyncadd [#allocation6], %s29
      %s31 = sshll.u32 [#allocation5], 4
      %s32 = int_to_ptr.vmem [resolvable:$true] %s31
      %37 = dma.hbm_to_vmem [thread:$0]  %s1, 512, %s32, [#allocation6], 128, 128, 8
    $region9: #{tpu_custom_call.1} parent=1 // pred_fallthru
      _
    // Predicated region
    $region10: #{tpu_custom_call.1} parent=1 // pred_check
      _
    $region11: #{tpu_custom_call.1} parent=1 // pred_check_branch
      %39 = sbr.rel (0) target = $region13
    $region12: #{tpu_custom_call.1} parent=1 // pred_region
      _
    $region13: #{tpu_custom_call.1} parent=1 // pred_fallthru
      _
    // Predicated region
    $region14: #{tpu_custom_call.1} parent=1 // pred_check
      _
    $region15: #{tpu_custom_call.1} parent=1 // pred_check_branch
      %41 = sbr.rel (0) target = $region17
    $region16: #{tpu_custom_call.1} parent=1 // pred_region
      %s43 = ssub.s32 2048, 2048
      %44 = vsyncadd [#allocation6], %s43
      %s45 = sshll.u32 [#allocation7], 4
      %s46 = int_to_ptr.vmem [resolvable:$true] %s45
      %51 = dma.hbm_to_vmem [thread:$0]  %s3, 2048, %s46, [#allocation6], 128, 128, 8
    $region17: #{tpu_custom_call.1} parent=1 // pred_fallthru
      _
    // Predicated region
    $region18: #{tpu_custom_call.1} parent=1 // pred_check
      _
    $region19: #{tpu_custom_call.1} parent=1 // pred_check_branch
      %53 = sbr.rel (0) target = $region21
    $region20: #{tpu_custom_call.1} parent=1 // pred_region
      _
    $region21: #{tpu_custom_call.1} parent=1 // pred_fallthru
      _
    // Predicated region
    $region22: #{tpu_custom_call.1} parent=1 // pred_check
      _
    $region23: #{tpu_custom_call.1} parent=1 // pred_check_branch
      %55 = sbr.rel (0) target = $region25
    $region24: #{tpu_custom_call.1} parent=1 // pred_region
      %s57 = ssub.s32 2048, 2048
      %58 = vsyncadd [#allocation9], %s57
      %s59 = sshll.u32 [#allocation8], 4
      %s60 = int_to_ptr.vmem [resolvable:$true] %s59
      %65 = dma.hbm_to_vmem [thread:$0]  %s5, 2048, %s60, [#allocation9], 128, 128, 8
    $region25: #{tpu_custom_call.1} parent=1 // pred_fallthru
      _
    // Predicated region
    $region26: #{tpu_custom_call.1} parent=1 // pred_check
      _
    $region27: #{tpu_custom_call.1} parent=1 // pred_check_branch
      %67 = sbr.rel (0) target = $region29
    $region28: #{tpu_custom_call.1} parent=1 // pred_region
      _
    $region29: #{tpu_custom_call.1} parent=1 // pred_fallthru
      _
    // Predicated region
    $region30: #{tpu_custom_call.1} parent=1 // pred_check
      _
    $region31: #{tpu_custom_call.1} parent=1 // pred_check_branch
      %69 = sbr.rel (0) target = $region33
    $region32: #{tpu_custom_call.1} parent=1 // pred_region
      %70 = dma.done [#allocation3], 128
    $region33: #{tpu_custom_call.1} parent=1 // pred_fallthru
      _
    // Predicated region
    $region34: #{tpu_custom_call.1} parent=1 // pred_check
      _
    $region35: #{tpu_custom_call.1} parent=1 // pred_check_branch
      %72 = sbr.rel (0) target = $region37
    $region36: #{tpu_custom_call.1} parent=1 // pred_region
      %73 = dma.done [#allocation6], 512
    $region37: #{tpu_custom_call.1} parent=1 // pred_fallthru
      _
    // Predicated region
    $region38: #{tpu_custom_call.1} parent=1 // pred_check
      _
    $region39: #{tpu_custom_call.1} parent=1 // pred_check_branch
      %75 = sbr.rel (0) target = $region41
    $region40: #{tpu_custom_call.1} parent=1 // pred_region
      %76 = dma.done [#allocation6], 2048
    $region41: #{tpu_custom_call.1} parent=1 // pred_fallthru
      _
    // Predicated region
    $region42: #{tpu_custom_call.1} parent=1 // pred_check
      _
    $region43: #{tpu_custom_call.1} parent=1 // pred_check_branch
      %78 = sbr.rel (0) target = $region45
    $region44: #{tpu_custom_call.1} parent=1 // pred_region
      %79 = dma.done [#allocation9], 2048
    $region45: #{tpu_custom_call.1} parent=1 // pred_fallthru
      _
    %v80 = vld [vmem:[#allocation2] sm:$0xff]
    %v81 = vld [vmem:[#allocation5] sm:$0xff]
    %v82 = vld [vmem:[#allocation5 + $0x8] sm:$0xff]
    %v83 = vld [vmem:[#allocation5 + $0x10] sm:$0xff]
    %v84 = vld [vmem:[#allocation5 + $0x18] sm:$0xff]
    %v85 = vld [vmem:[%s2] sm:$0x1]
    %v87 = vlaneseq
    %v88 = vshrl.u32 %v87, 7
    %v89 = vsub.s32 0, %v88
    %v90 = vrot.slane %v85, %v89
    %vm92 = vcmask 261120
    %v94 = vsel %vm92, %v80, 0
    %96 = vmatprep.subr.mxu0 0.0
    %97 = vmatpush1.msra.mxu0 %v81
    %98 = vmatprep.subr.mxu0 0.0
    %99 = vmatpush1.msra.mxu0 %v82
    %100 = vmatprep.subr.mxu0 0.0
    %101 = vmatpush1.msra.mxu0 %v83
    %102 = vmatprep.subr.mxu0 0.0
    %103 = vmatpush1.msra.mxu0 %v84
    %104 = vmatprep.subr.mxu0 0.0
    %105 = vmatpush1.msra.mxu0 0.0
    %106 = vmatprep.subr.mxu0 0.0
    %107 = vmatpush1.msra.mxu0 0.0
    %108 = vmatprep.subr.mxu0 0.0
    %109 = vmatpush1.msra.mxu0 0.0
    %110 = vmatprep.subr.mxu0 0.0
    %111 = vmatpush1.msra.mxu0 0.0
    %112 = vmatprep.subr.mxu0 0.0
    %113 = vmatpush1.msra.mxu0 0.0
    %114 = vmatprep.subr.mxu0 0.0
    %115 = vmatpush1.msra.mxu0 0.0
    %116 = vmatprep.subr.mxu0 0.0
    %117 = vmatpush1.msra.mxu0 0.0
    %118 = vmatprep.subr.mxu0 0.0
    %119 = vmatpush1.msra.mxu0 0.0
    %120 = vmatprep.subr.mxu0 0.0
    %121 = vmatpush1.msra.mxu0 0.0
    %122 = vmatprep.subr.mxu0 0.0
    %123 = vmatpush1.msra.mxu0 0.0
    %124 = vmatprep.subr.mxu0 0.0
    %125 = vmatpush1.msra.mxu0 0.0
    %126 = vmatprep.subr.mxu0 0.0
    %127 = vmatpush1.msra.mxu0 0.0
    %128 = vmatprep.subr.mxu0 0.0
    %129 = vmatpush1.msra.mxu0 0.0
    %130 = vmatprep.subr.mxu0 0.0
    %131 = vmatpush1.msra.mxu0 0.0
    %132 = vmatprep.subr.mxu0 0.0
    %133 = vmatpush1.msra.mxu0 0.0
    %134 = vmatprep.subr.mxu0 0.0
    %135 = vmatpush1.msra.mxu0 0.0
    %136 = vmatprep.subr.mxu0 0.0
    %137 = vmatpush1.msra.mxu0 0.0
    %138 = vmatprep.subr.mxu0 0.0
    %139 = vmatpush1.msra.mxu0 0.0
    %140 = vmatprep.subr.mxu0 0.0
    %141 = vmatpush1.msra.mxu0 0.0
    %142 = vmatprep.subr.mxu0 0.0
    %143 = vmatpush1.msra.mxu0 0.0
    %144 = vmatprep.subr.mxu0 0.0
    %145 = vmatpush1.msra.mxu0 0.0
    %146 = vmatprep.subr.mxu0 0.0
    %147 = vmatpush1.msra.mxu0 0.0
    %148 = vmatprep.subr.mxu0 0.0
    %149 = vmatpush1.msra.mxu0 0.0
    %150 = vmatprep.subr.mxu0 0.0
    %151 = vmatpush1.msra.mxu0 0.0
    %152 = vmatprep.subr.mxu0 0.0
    %153 = vmatpush1.msra.mxu0 0.0
    %154 = vmatprep.subr.mxu0 0.0
    %155 = vmatpush1.msra.mxu0 0.0
    %156 = vmatprep.subr.mxu0 0.0
    %157 = vmatpush1.msra.mxu0 0.0
    %158 = vmatprep.subr.mxu0 0.0
    %159 = vmatpush1.msra.mxu0 0.0
    %160 = vmatprep.mubr.f32.mxu0 0.0
    %161 = vmatmul.mubr.f32.gmra.mrb[0].mxu0 %v94
    %v162 = vpop.f32.mrb[0].mxu0
    %v163 = vadd.f32 %v90, %v162
    %v164 = vpop.f32.mrb[0].mxu0
    %165 = vdwg.mxu0
    %v166 = vmul.f32 %v163, 0.2
    %v167 = vmax.f32 %v163, %v166
    %v168 = vld [vmem:[#allocation7] sm:$0xff]
    %v169 = vld [vmem:[#allocation7 + $0x8] sm:$0xff]
    %v170 = vld [vmem:[#allocation7 + $0x10] sm:$0xff]
    %v171 = vld [vmem:[#allocation7 + $0x18] sm:$0xff]
    %v172 = vld [vmem:[#allocation7 + $0x20] sm:$0xff]
    %v173 = vld [vmem:[#allocation7 + $0x28] sm:$0xff]
    %v174 = vld [vmem:[#allocation7 + $0x30] sm:$0xff]
    %v175 = vld [vmem:[#allocation7 + $0x38] sm:$0xff]
    %v176 = vld [vmem:[#allocation7 + $0x40] sm:$0xff]
    %v177 = vld [vmem:[#allocation7 + $0x48] sm:$0xff]
    %v178 = vld [vmem:[#allocation7 + $0x50] sm:$0xff]
    %v179 = vld [vmem:[#allocation7 + $0x58] sm:$0xff]
    %v180 = vld [vmem:[#allocation7 + $0x60] sm:$0xff]
    %v181 = vld [vmem:[#allocation7 + $0x68] sm:$0xff]
    %v182 = vld [vmem:[#allocation7 + $0x70] sm:$0xff]
    %v183 = vld [vmem:[#allocation7 + $0x78] sm:$0xff]
    %v184 = vld [vmem:[%s4] sm:$0x1]
    %v186 = vlaneseq
    %v187 = vshrl.u32 %v186, 7
    %v188 = vsub.s32 0, %v187
    %v189 = vrot.slane %v184, %v188
    %191 = vmatprep.subr.mxu0 0.0
    %192 = vmatpush1.msra.mxu0 %v168
    %193 = vmatprep.subr.mxu0 0.0
    %194 = vmatpush1.msra.mxu0 %v169
    %195 = vmatprep.subr.mxu0 0.0
    %196 = vmatpush1.msra.mxu0 %v170
    %197 = vmatprep.subr.mxu0 0.0
    %198 = vmatpush1.msra.mxu0 %v171
    %199 = vmatprep.subr.mxu0 0.0
    %200 = vmatpush1.msra.mxu0 %v172
    %201 = vmatprep.subr.mxu0 0.0
    %202 = vmatpush1.msra.mxu0 %v173
    %203 = vmatprep.subr.mxu0 0.0
    %204 = vmatpush1.msra.mxu0 %v174
    %205 = vmatprep.subr.mxu0 0.0
    %206 = vmatpush1.msra.mxu0 %v175
    %207 = vmatprep.subr.mxu0 0.0
    %208 = vmatpush1.msra.mxu0 %v176
    %209 = vmatprep.subr.mxu0 0.0
    %210 = vmatpush1.msra.mxu0 %v177
    %211 = vmatprep.subr.mxu0 0.0
    %212 = vmatpush1.msra.mxu0 %v178
    %213 = vmatprep.subr.mxu0 0.0
    %214 = vmatpush1.msra.mxu0 %v179
    %215 = vmatprep.subr.mxu0 0.0
    %216 = vmatpush1.msra.mxu0 %v180
    %217 = vmatprep.subr.mxu0 0.0
    %218 = vmatpush1.msra.mxu0 %v181
    %219 = vmatprep.subr.mxu0 0.0
    %220 = vmatpush1.msra.mxu0 %v182
    %221 = vmatprep.subr.mxu0 0.0
    %222 = vmatpush1.msra.mxu0 %v183
    %223 = vmatprep.subr.mxu0 0.0
    %224 = vmatpush1.msra.mxu0 0.0
    %225 = vmatprep.subr.mxu0 0.0
    %226 = vmatpush1.msra.mxu0 0.0
    %227 = vmatprep.subr.mxu0 0.0
    %228 = vmatpush1.msra.mxu0 0.0
    %229 = vmatprep.subr.mxu0 0.0
    %230 = vmatpush1.msra.mxu0 0.0
    %231 = vmatprep.subr.mxu0 0.0
    %232 = vmatpush1.msra.mxu0 0.0
    %233 = vmatprep.subr.mxu0 0.0
    %234 = vmatpush1.msra.mxu0 0.0
    %235 = vmatprep.subr.mxu0 0.0
    %236 = vmatpush1.msra.mxu0 0.0
    %237 = vmatprep.subr.mxu0 0.0
    %238 = vmatpush1.msra.mxu0 0.0
    %239 = vmatprep.subr.mxu0 0.0
    %240 = vmatpush1.msra.mxu0 0.0
    %241 = vmatprep.subr.mxu0 0.0
    %242 = vmatpush1.msra.mxu0 0.0
    %243 = vmatprep.subr.mxu0 0.0
    %244 = vmatpush1.msra.mxu0 0.0
    %245 = vmatprep.subr.mxu0 0.0
    %246 = vmatpush1.msra.mxu0 0.0
    %247 = vmatprep.subr.mxu0 0.0
    %248 = vmatpush1.msra.mxu0 0.0
    %249 = vmatprep.subr.mxu0 0.0
    %250 = vmatpush1.msra.mxu0 0.0
    %251 = vmatprep.subr.mxu0 0.0
    %252 = vmatpush1.msra.mxu0 0.0
    %253 = vmatprep.subr.mxu0 0.0
    %254 = vmatpush1.msra.mxu0 0.0
    %255 = vmatprep.mubr.f32.mxu0 0.0
    %256 = vmatmul.mubr.f32.gmra.mrb[0].mxu0 %v167
    %v257 = vpop.f32.mrb[0].mxu0
    %v258 = vadd.f32 %v189, %v257
    %v259 = vpop.f32.mrb[0].mxu0
    %260 = vdwg.mxu0
    %v261 = vmul.f32 %v258, 0.2
    %v262 = vmax.f32 %v258, %v261
    %v263 = vld [vmem:[#allocation8] sm:$0xff]
    %v264 = vld [vmem:[#allocation8 + $0x8] sm:$0xff]
    %v265 = vld [vmem:[#allocation8 + $0x10] sm:$0xff]
    %v266 = vld [vmem:[#allocation8 + $0x18] sm:$0xff]
    %v267 = vld [vmem:[#allocation8 + $0x20] sm:$0xff]
    %v268 = vld [vmem:[#allocation8 + $0x28] sm:$0xff]
    %v269 = vld [vmem:[#allocation8 + $0x30] sm:$0xff]
    %v270 = vld [vmem:[#allocation8 + $0x38] sm:$0xff]
    %v271 = vld [vmem:[#allocation8 + $0x40] sm:$0xff]
    %v272 = vld [vmem:[#allocation8 + $0x48] sm:$0xff]
    %v273 = vld [vmem:[#allocation8 + $0x50] sm:$0xff]
    %v274 = vld [vmem:[#allocation8 + $0x58] sm:$0xff]
    %v275 = vld [vmem:[#allocation8 + $0x60] sm:$0xff]
    %v276 = vld [vmem:[#allocation8 + $0x68] sm:$0xff]
    %v277 = vld [vmem:[#allocation8 + $0x70] sm:$0xff]
    %v278 = vld [vmem:[#allocation8 + $0x78] sm:$0xff]
    %v279 = vld [vmem:[%s6] sm:$0x1]
    %v281 = vlaneseq
    %v282 = vshrl.u32 %v281, 7
    %v283 = vsub.s32 0, %v282
    %v284 = vrot.slane %v279, %v283
    %286 = vmatprep.subr.mxu0 0.0
    %287 = vmatpush1.msra.mxu0 %v263
    %288 = vmatprep.subr.mxu0 0.0
    %289 = vmatpush1.msra.mxu0 %v264
    %290 = vmatprep.subr.mxu0 0.0
    %291 = vmatpush1.msra.mxu0 %v265
    %292 = vmatprep.subr.mxu0 0.0
    %293 = vmatpush1.msra.mxu0 %v266
    %294 = vmatprep.subr.mxu0 0.0
    %295 = vmatpush1.msra.mxu0 %v267
    %296 = vmatprep.subr.mxu0 0.0
    %297 = vmatpush1.msra.mxu0 %v268
    %298 = vmatprep.subr.mxu0 0.0
    %299 = vmatpush1.msra.mxu0 %v269
    %300 = vmatprep.subr.mxu0 0.0
    %301 = vmatpush1.msra.mxu0 %v270
    %302 = vmatprep.subr.mxu0 0.0
    %303 = vmatpush1.msra.mxu0 %v271
    %304 = vmatprep.subr.mxu0 0.0
    %305 = vmatpush1.msra.mxu0 %v272
    %306 = vmatprep.subr.mxu0 0.0
    %307 = vmatpush1.msra.mxu0 %v273
    %308 = vmatprep.subr.mxu0 0.0
    %309 = vmatpush1.msra.mxu0 %v274
    %310 = vmatprep.subr.mxu0 0.0
    %311 = vmatpush1.msra.mxu0 %v275
    %312 = vmatprep.subr.mxu0 0.0
    %313 = vmatpush1.msra.mxu0 %v276
    %314 = vmatprep.subr.mxu0 0.0
    %315 = vmatpush1.msra.mxu0 %v277
    %316 = vmatprep.subr.mxu0 0.0
    %317 = vmatpush1.msra.mxu0 %v278
    %318 = vmatprep.subr.mxu0 0.0
    %319 = vmatpush1.msra.mxu0 0.0
    %320 = vmatprep.subr.mxu0 0.0
    %321 = vmatpush1.msra.mxu0 0.0
    %322 = vmatprep.subr.mxu0 0.0
    %323 = vmatpush1.msra.mxu0 0.0
    %324 = vmatprep.subr.mxu0 0.0
    %325 = vmatpush1.msra.mxu0 0.0
    %326 = vmatprep.subr.mxu0 0.0
    %327 = vmatpush1.msra.mxu0 0.0
    %328 = vmatprep.subr.mxu0 0.0
    %329 = vmatpush1.msra.mxu0 0.0
    %330 = vmatprep.subr.mxu0 0.0
    %331 = vmatpush1.msra.mxu0 0.0
    %332 = vmatprep.subr.mxu0 0.0
    %333 = vmatpush1.msra.mxu0 0.0
    %334 = vmatprep.subr.mxu0 0.0
    %335 = vmatpush1.msra.mxu0 0.0
    %336 = vmatprep.subr.mxu0 0.0
    %337 = vmatpush1.msra.mxu0 0.0
    %338 = vmatprep.subr.mxu0 0.0
    %339 = vmatpush1.msra.mxu0 0.0
    %340 = vmatprep.subr.mxu0 0.0
    %341 = vmatpush1.msra.mxu0 0.0
    %342 = vmatprep.subr.mxu0 0.0
    %343 = vmatpush1.msra.mxu0 0.0
    %344 = vmatprep.subr.mxu0 0.0
    %345 = vmatpush1.msra.mxu0 0.0
    %346 = vmatprep.subr.mxu0 0.0
    %347 = vmatpush1.msra.mxu0 0.0
    %348 = vmatprep.subr.mxu0 0.0
    %349 = vmatpush1.msra.mxu0 0.0
    %350 = vmatprep.mubr.f32.mxu0 0.0
    %351 = vmatmul.mubr.f32.gmra.mrb[0].mxu0 %v262
    %v352 = vpop.f32.mrb[0].mxu0
    %v353 = vadd.f32 %v284, %v352
    %v354 = vpop.f32.mrb[0].mxu0
    %355 = vdwg.mxu0
    %356 = vst [vmem:[#allocation10] sm:$0xff] %v353
    // Predicated region
    $region46: #{tpu_custom_call.1} parent=1 // pred_check
      _
    $region47: #{tpu_custom_call.1} parent=1 // pred_check_branch
      %358 = sbr.rel (0) target = $region49
    $region48: #{tpu_custom_call.1} parent=1 // pred_region
      %s360 = ssub.s32 128, 128
      %361 = vsyncadd [#allocation4], %s360
      %s363 = sshll.u32 [#allocation10], 4
      %s364 = int_to_ptr.vmem [resolvable:$true] %s363
      %366 = dma.vmem_to_hbm [thread:$0]  %s364, 128, %s7, [#allocation4]
    $region49: #{tpu_custom_call.1} parent=1 // pred_fallthru
      _
    // Predicated region
    $region50: #{tpu_custom_call.1} parent=1 // pred_check
      _
    $region51: #{tpu_custom_call.1} parent=1 // pred_check_branch
      %368 = sbr.rel (0) target = $region53
    $region52: #{tpu_custom_call.1} parent=1 // pred_region
      %369 = dma.done [#allocation4], 128
    $region53: #{tpu_custom_call.1} parent=1 // pred_fallthru
      _
    %370 = vsyncpa [#allocation3], 1
    %371 = vsyncpa [#allocation6], 1
    %372 = vsyncpa [#allocation9], 1
    %373 = vsyncpa [#allocation4], 1

</llo_original>
